<compile_context>
chip_gen: v6e
topology: v6e:2x2x1
jax: 0.10.0
libtpu: 0.0.40
codegen_flags: <defaults>
</compile_context>

<pallas_src>
import math

import numpy as np
import jax
import jax.numpy as jnp
from jax import lax
from jax.experimental import pallas as pl
from jax.experimental.pallas import tpu as pltpu  # noqa: F401  (gridless call uses defaults)

# ---------------------------------------------------------------------------
# problem sizes: SliceUpsamp(c1=16, c2=8) on a (2, 16, 8, 8) NCHW input.
#   c = c1 // 4 = 4 channels after the slice upsample, spatial 8x8 -> 16x16.
# ---------------------------------------------------------------------------
N = 2
C_IN = 16                 # c1 (PyTorch input channels)
C1 = C_IN // 4            # channels after the slice upsample (DSConv input)
C2 = 8                    # DSConv output channels
H0, W0 = 8, 8             # input spatial size
HZ, WZ = 2 * H0, 2 * W0   # upsampled spatial size (16, 16)
K = 3
EPS = 1e-5

L1 = N * WZ * C1          # 128: packed lane width of the depthwise stage
L2 = N * WZ * C2          # 256: packed lane width of the output stage


def _gelu_exact(v):
    # PyTorch nn.GELU() default = exact erf formulation (kept for parity).
    return 0.5 * v * (1.0 + lax.erf(v * (1.0 / math.sqrt(2.0))))


# ---------------------------------------------------------------------------
# Pallas kernel: gridless, whole arrays resident in VMEM.
# ---------------------------------------------------------------------------
def slice_upsamp_kernel(zp_ref, dwm_ref, dwb_ref, pwm_ref, pwb_ref, o_ref):
    # zp_ref : (HZ+2, L1) slice-upsampled input, lane-packed as
    #          [h, (n*WZ + w)*C1 + c], with one zero row of padding top/bottom.
    # dwm_ref: (K, L1, L1) banded depthwise matrices (one per kernel row dy);
    #          depth-BN scale already folded into the weights.
    # dwb_ref: (1, L1)     depth-BN bias, tiled over the (n, w) lane groups.
    # pwm_ref: (L1, L2)    block-diagonal pointwise matrix (point-BN scale folded).
    # pwb_ref: (1, L2)     point-BN bias, tiled over the (n, w) lane groups.
    # o_ref  : (HZ, L2)    output, lane-packed as [h, (n*WZ + w)*C2 + c2].
    acc = jnp.dot(zp_ref[0:HZ, :], dwm_ref[0],
                  preferred_element_type=jnp.float32)          # rows z[h-1]
    acc = acc + jnp.dot(zp_ref[1:HZ + 1, :], dwm_ref[1],
                        preferred_element_type=jnp.float32)    # rows z[h]
    acc = acc + jnp.dot(zp_ref[2:HZ + 2, :], dwm_ref[2],
                        preferred_element_type=jnp.float32)    # rows z[h+1]
    y = _gelu_exact(acc + dwb_ref[...])                        # depthwise+BN+GELU

    z = jnp.dot(y, pwm_ref[...], preferred_element_type=jnp.float32)
    o_ref[...] = _gelu_exact(z + pwb_ref[...]).astype(o_ref.dtype)


# ---------------------------------------------------------------------------
# wrapper-side layout / weight preparation (all cheap, trace-time index math)
# ---------------------------------------------------------------------------
def _pack_slice_upsample(x_nchw):
    """(N, 4*C1, H0, W0) -> (HZ+2, L1) lane-packed, row-padded, upsampled z.

    channel block g = 2*s + r;  z[n, c, 2i+r, 2j+s] = x[n, g*C1 + c, i, j]
    packed layout: zp[1 + (2i+r), (n*WZ + (2j+s))*C1 + c]
    """
    x5 = x_nchw.reshape(N, 2, 2, C1, H0, W0)          # (n, s, r, c, i, j)
    zt = jnp.transpose(x5, (4, 2, 0, 5, 1, 3))        # (i, r, n, j, s, c)
    zpk = zt.reshape(HZ, L1)
    return jnp.pad(zpk, ((1, 1), (0, 0)))             # zero rows for h padding


def _build_depthwise_mats(dw_w_scaled):
    """dw_w_scaled: (K, K, C1) = wt[dy, dx, c] (BN scale folded) ->
       (K, L1, L1) banded lane-mixing matrices, entry [l_in, l_out] =
       wt[dy, w_in - w_out + 1, c] when n/c match and |w_in - w_out| <= 1."""
    li = np.arange(L1)
    n_i = li // (WZ * C1)
    w_i = (li // C1) % WZ
    c_i = li % C1
    dx = w_i[:, None] - w_i[None, :] + 1              # rows = l_in, cols = l_out
    valid = ((n_i[:, None] == n_i[None, :]) &
             (c_i[:, None] == c_i[None, :]) &
             (dx >= 0) & (dx < K))
    dx_idx = np.clip(dx, 0, K - 1)
    c_idx = np.broadcast_to(c_i[:, None], (L1, L1))
    gathered = dw_w_scaled[:, dx_idx, c_idx]          # (K, L1, L1)
    return jnp.where(valid[None, :, :], gathered, 0.0)


def _build_pointwise_mat(pw_w_scaled):
    """pw_w_scaled: (C1, C2) (BN scale folded) -> (L1, L2) block-diagonal
       lane-mixing matrix (one (C1, C2) block per (n, w) lane group)."""
    li = np.arange(L1)
    lo = np.arange(L2)
    blk_i, c1_i = li // C1, li % C1
    blk_o, c2_o = lo // C2, lo % C2
    valid = blk_i[:, None] == blk_o[None, :]
    gathered = pw_w_scaled[c1_i[:, None], c2_o[None, :]]   # (L1, L2)
    return jnp.where(valid, gathered, 0.0)


def slice_upsamp_forward(x_nchw, dw_w, dw_gamma, dw_beta, dw_mean, dw_var,
                         pw_w, pw_gamma, pw_beta, pw_mean, pw_var):
    """SliceUpsamp forward (eval-mode BN). NCHW in -> NCHW out."""
    # fold BN into per-channel scale/bias; fold the scale into the conv weights
    dw_scale = dw_gamma * lax.rsqrt(dw_var + EPS)          # (C1,)
    dw_bias = dw_beta - dw_mean * dw_scale
    pw_scale = pw_gamma * lax.rsqrt(pw_var + EPS)          # (C2,)
    pw_bias = pw_beta - pw_mean * pw_scale

    # depthwise weight (C1, 1, K, K) -> wt[dy, dx, c] * scale[c]
    dw_w_scaled = jnp.transpose(dw_w[:, 0, :, :], (1, 2, 0)) * dw_scale
    # pointwise weight (C2, C1, 1, 1) -> pw[c1, c2] * scale[c2]
    pw_w_scaled = jnp.transpose(pw_w[:, :, 0, 0], (1, 0)) * pw_scale

    dwm = _build_depthwise_mats(dw_w_scaled)               # (K, L1, L1)
    pwm = _build_pointwise_mat(pw_w_scaled)                # (L1, L2)
    dwb = jnp.tile(dw_bias, N * WZ).reshape(1, L1)
    pwb = jnp.tile(pw_bias, N * WZ).reshape(1, L2)

    zp = _pack_slice_upsample(x_nchw)                      # (HZ+2, L1)

    out_packed = pl.pallas_call(
        slice_upsamp_kernel,
        out_shape=jax.ShapeDtypeStruct((HZ, L2), jnp.float32),
    )(zp, dwm, dwb, pwm, pwb)

    # [h, (n*WZ + w)*C2 + c2] -> NCHW (N, C2, HZ, WZ)
    return jnp.transpose(out_packed.reshape(HZ, N, WZ, C2), (1, 3, 0, 2))


# ---------------------------------------------------------------------------
# pure-JAX reference (mirrors the PyTorch forward exactly, NCHW)
# ---------------------------------------------------------------------------
def slice_upsamp_ref(x_nchw, dw_w, dw_gamma, dw_beta, dw_mean, dw_var,
                     pw_w, pw_gamma, pw_beta, pw_mean, pw_var):
    c = C1
    b = x_nchw.shape[0]
    z = jnp.zeros((b, c, HZ, WZ), x_nchw.dtype)
    z = z.at[:, :, ::2, ::2].set(x_nchw[:, :c])
    z = z.at[:, :, 1::2, ::2].set(x_nchw[:, c:2 * c])
    z = z.at[:, :, ::2, 1::2].set(x_nchw[:, 2 * c:3 * c])
    z = z.at[:, :, 1::2, 1::2].set(x_nchw[:, 3 * c:])

    dw_scale = dw_gamma * lax.rsqrt(dw_var + EPS)
    dw_bias = dw_beta - dw_mean * dw_scale
    pw_scale = pw_gamma * lax.rsqrt(pw_var + EPS)
    pw_bias = pw_beta - pw_mean * pw_scale

    y = lax.conv_general_dilated(
        z, dw_w, window_strides=(1, 1), padding=((1, 1), (1, 1)),
        dimension_numbers=("NCHW", "OIHW", "NCHW"),
        feature_group_count=c, precision=lax.Precision.HIGHEST)
    y = jax.nn.gelu(y * dw_scale[None, :, None, None]
                    + dw_bias[None, :, None, None], approximate=False)

    out = lax.conv_general_dilated(
        y, pw_w, window_strides=(1, 1), padding=((0, 0), (0, 0)),
        dimension_numbers=("NCHW", "OIHW", "NCHW"),
        precision=lax.Precision.HIGHEST)
    out = jax.nn.gelu(out * pw_scale[None, :, None, None]
                      + pw_bias[None, :, None, None], approximate=False)
    return out


if __name__ == "__main__":
    key = jax.random.PRNGKey(0)
    ks = jax.random.split(key, 11)

    # PyTorch-layout input and parameters
    x = jax.random.normal(ks[0], (N, C_IN, H0, W0), jnp.float32)

    dw_w = jax.random.normal(ks[1], (C1, 1, K, K), jnp.float32) * 0.3
    dw_gamma = 1.0 + 0.1 * jax.random.normal(ks[2], (C1,), jnp.float32)
    dw_beta = 0.1 * jax.random.normal(ks[3], (C1,), jnp.float32)
    dw_mean = 0.1 * jax.random.normal(ks[4], (C1,), jnp.float32)
    dw_var = jnp.abs(jax.random.normal(ks[5], (C1,), jnp.float32)) + 0.5

    pw_w = jax.random.normal(ks[6], (C2, C1, 1, 1), jnp.float32) * 0.3
    pw_gamma = 1.0 + 0.1 * jax.random.normal(ks[7], (C2,), jnp.float32)
    pw_beta = 0.1 * jax.random.normal(ks[8], (C2,), jnp.float32)
    pw_mean = 0.1 * jax.random.normal(ks[9], (C2,), jnp.float32)
    pw_var = jnp.abs(jax.random.normal(ks[10], (C2,), jnp.float32)) + 0.5

    args = (x, dw_w, dw_gamma, dw_beta, dw_mean, dw_var,
            pw_w, pw_gamma, pw_beta, pw_mean, pw_var)

    fwd = jax.jit(slice_upsamp_forward)
    out = jax.block_until_ready(fwd(*args))

    ref = slice_upsamp_ref(*args)
    assert out.shape == (N, C2, HZ, WZ), out.shape
    max_err = float(jnp.max(jnp.abs(out - ref)))
    assert jnp.allclose(out, ref, atol=2e-4, rtol=2e-4), f"mismatch: {max_err}"

    print("KERNEL_OK")
</pallas_src>

<mosaic_0001>
module attributes {stable_mosaic.version = 11 : i64} {
  func.func @slice_upsamp_kernel(%arg0: memref<18x128xf32, #tpu.memory_space<vmem>>, %arg1: memref<3x128x128xf32, #tpu.memory_space<vmem>>, %arg2: memref<1x128xf32, #tpu.memory_space<vmem>>, %arg3: memref<128x256xf32, #tpu.memory_space<vmem>>, %arg4: memref<1x256xf32, #tpu.memory_space<vmem>>, %arg5: memref<16x256xf32, #tpu.memory_space<vmem>>) attributes {dimension_semantics = [], scalar_prefetch = 0 : i64, scratch_operands = 0 : i64, tpu.core_type = #tpu.core_type<tc>} {
    %c0 = arith.constant 0 : index
    %c0_0 = arith.constant 0 : index
    %0 = vector.load %arg0[%c0, %c0_0] : memref<18x128xf32, #tpu.memory_space<vmem>>, vector<16x128xf32>
    %c0_1 = arith.constant 0 : index
    %c0_2 = arith.constant 0 : index
    %c0_3 = arith.constant 0 : index
    %1 = vector.load %arg1[%c0_1, %c0_2, %c0_3] : memref<3x128x128xf32, #tpu.memory_space<vmem>>, vector<1x128x128xf32>
    %2 = vector.shape_cast %1 : vector<1x128x128xf32> to vector<128x128xf32>
    %cst = arith.constant dense<0.000000e+00> : vector<16x128xf32>
    %3 = tpu.matmul %0, %2, %cst {dimension_numbers = #tpu.dot_dimension_numbers<[1], [0], [0], [1], [0, 0, 1, 1], [], []>} : vector<16x128xf32>, vector<128x128xf32>, vector<16x128xf32> -> vector<16x128xf32>
    %c1 = arith.constant 1 : index
    %c0_4 = arith.constant 0 : index
    %4 = vector.load %arg0[%c1, %c0_4] : memref<18x128xf32, #tpu.memory_space<vmem>>, vector<16x128xf32>
    %c1_5 = arith.constant 1 : index
    %c0_6 = arith.constant 0 : index
    %c0_7 = arith.constant 0 : index
    %5 = vector.load %arg1[%c1_5, %c0_6, %c0_7] : memref<3x128x128xf32, #tpu.memory_space<vmem>>, vector<1x128x128xf32>
    %6 = vector.shape_cast %5 : vector<1x128x128xf32> to vector<128x128xf32>
    %cst_8 = arith.constant dense<0.000000e+00> : vector<16x128xf32>
    %7 = tpu.matmul %4, %6, %cst_8 {dimension_numbers = #tpu.dot_dimension_numbers<[1], [0], [0], [1], [0, 0, 1, 1], [], []>} : vector<16x128xf32>, vector<128x128xf32>, vector<16x128xf32> -> vector<16x128xf32>
    %8 = arith.addf %3, %7 : vector<16x128xf32>
    %c2 = arith.constant 2 : index
    %c0_9 = arith.constant 0 : index
    %9 = vector.load %arg0[%c2, %c0_9] : memref<18x128xf32, #tpu.memory_space<vmem>>, vector<16x128xf32>
    %c2_10 = arith.constant 2 : index
    %c0_11 = arith.constant 0 : index
    %c0_12 = arith.constant 0 : index
    %10 = vector.load %arg1[%c2_10, %c0_11, %c0_12] : memref<3x128x128xf32, #tpu.memory_space<vmem>>, vector<1x128x128xf32>
    %11 = vector.shape_cast %10 : vector<1x128x128xf32> to vector<128x128xf32>
    %cst_13 = arith.constant dense<0.000000e+00> : vector<16x128xf32>
    %12 = tpu.matmul %9, %11, %cst_13 {dimension_numbers = #tpu.dot_dimension_numbers<[1], [0], [0], [1], [0, 0, 1, 1], [], []>} : vector<16x128xf32>, vector<128x128xf32>, vector<16x128xf32> -> vector<16x128xf32>
    %13 = arith.addf %8, %12 : vector<16x128xf32>
    %c0_14 = arith.constant 0 : index
    %c0_15 = arith.constant 0 : index
    %14 = vector.load %arg2[%c0_14, %c0_15] : memref<1x128xf32, #tpu.memory_space<vmem>>, vector<1x128xf32>
    %15 = vector.broadcast %14 : vector<1x128xf32> to vector<16x128xf32>
    %16 = arith.addf %13, %15 : vector<16x128xf32>
    %cst_16 = arith.constant 5.000000e-01 : f32
    %17 = vector.broadcast %cst_16 : f32 to vector<16x128xf32>
    %18 = arith.mulf %17, %16 : vector<16x128xf32>
    %cst_17 = arith.constant 0.707106769 : f32
    %19 = vector.broadcast %cst_17 : f32 to vector<16x128xf32>
    %20 = arith.mulf %16, %19 : vector<16x128xf32>
    %21 = math.erf %20 : vector<16x128xf32>
    %cst_18 = arith.constant 1.000000e+00 : f32
    %22 = vector.broadcast %cst_18 : f32 to vector<16x128xf32>
    %23 = arith.addf %22, %21 : vector<16x128xf32>
    %24 = arith.mulf %18, %23 : vector<16x128xf32>
    %c0_19 = arith.constant 0 : index
    %c0_20 = arith.constant 0 : index
    %25 = vector.load %arg3[%c0_19, %c0_20] : memref<128x256xf32, #tpu.memory_space<vmem>>, vector<128x256xf32>
    %cst_21 = arith.constant dense<0.000000e+00> : vector<16x256xf32>
    %26 = tpu.matmul %24, %25, %cst_21 {dimension_numbers = #tpu.dot_dimension_numbers<[1], [0], [0], [1], [0, 0, 1, 1], [], []>} : vector<16x128xf32>, vector<128x256xf32>, vector<16x256xf32> -> vector<16x256xf32>
    %c0_22 = arith.constant 0 : index
    %c0_23 = arith.constant 0 : index
    %27 = vector.load %arg4[%c0_22, %c0_23] : memref<1x256xf32, #tpu.memory_space<vmem>>, vector<1x256xf32>
    %28 = vector.broadcast %27 : vector<1x256xf32> to vector<16x256xf32>
    %29 = arith.addf %26, %28 : vector<16x256xf32>
    %cst_24 = arith.constant 5.000000e-01 : f32
    %30 = vector.broadcast %cst_24 : f32 to vector<16x256xf32>
    %31 = arith.mulf %30, %29 : vector<16x256xf32>
    %cst_25 = arith.constant 0.707106769 : f32
    %32 = vector.broadcast %cst_25 : f32 to vector<16x256xf32>
    %33 = arith.mulf %29, %32 : vector<16x256xf32>
    %34 = math.erf %33 : vector<16x256xf32>
    %cst_26 = arith.constant 1.000000e+00 : f32
    %35 = vector.broadcast %cst_26 : f32 to vector<16x256xf32>
    %36 = arith.addf %35, %34 : vector<16x256xf32>
    %37 = arith.mulf %31, %36 : vector<16x256xf32>
    %c0_27 = arith.constant 0 : index
    %c0_28 = arith.constant 0 : index
    %38 = vector.load %arg5[%c0_27, %c0_28] : memref<16x256xf32, #tpu.memory_space<vmem>>, vector<16x256xf32>
    tpu.vector_store %arg5[%c0_27, %c0_28], %37 {strides = array<i32>} : memref<16x256xf32, #tpu.memory_space<vmem>>, vector<16x256xf32>,
    return
  }
}

</mosaic_0001>

<llo_original>
// kernel: tile.18
$region0: #{tile.18}
  #allocation0 [shape = 's32[1]{0}', space=sflag, size = 0x4, scoped, tag = 'scoped memory for tile.18']
  %s0 = inlined_call_operand.vmem [shape: f32[8], index: 0, kind: input, shape index: {}]
  %s1 = inlined_call_operand.vmem [shape: f32[32,8], index: 1, kind: output, shape index: {}]
  // Predicated region
  $region2: #{tile.18} parent=0 // pred_check
    _
  $region3: #{tile.18} parent=0 // pred_check_branch
    %3 = sbr.rel (0) target = $region5
  $region4: #{tile.18} parent=0 // pred_region
    _
  $region5: #{tile.18} parent=0 // pred_fallthru
    _
  %v4 = vld [vmem:[%s0] ss:$0 sm:$0xff]
  %5 = vst [vmem:[%s1] sm:$0xff] %v4
  %s6 = scalar_lea.vmem %s1, 8
  %7 = vst [vmem:[%s6] sm:$0xff] %v4
  %s8 = scalar_lea.vmem %s1, 16
  %9 = vst [vmem:[%s8] sm:$0xff] %v4
  %s10 = scalar_lea.vmem %s1, 24
  %11 = vst [vmem:[%s10] sm:$0xff] %v4

// kernel: tile.19
$region0: #{tile.19}
  %s0 = inlined_call_operand.vmem [shape: f32[32,8], index: 0, kind: input, shape index: {}]
  %s1 = inlined_call_operand.vmem [shape: f32[1,256], index: 1, kind: output, shape index: {}]
  $region1: #{tile.19} parent=0
    #allocation0 [shape = 'u8[8192]{0}', space=vmem, size = 0x2000, scoped, tag = 'scoped mem for output reshape']
    %s2 = smov 3
    %v3 = vld [vmem:[%s0] ss:$16 sm:%s2]
    %vm4 = vcmask 64512
    %5 = vst.msk [vmem:[#allocation0] ss:$8 sm:$0x3] %vm4, %v3
    %s6 = scalar_lea.vmem %s0, 15
    %s7 = smov 3
    %v8 = vld [vmem:[%s6] ss:$16 sm:%s7]
    %9 = vrot.lane.b32.xlu0 %v8, 120
    %v10 = vpop.permute.xlu0 %9
    %vm11 = vcmask 1048512
    %12 = vst.msk [vmem:[#allocation0] ss:$8 sm:$0x3] %vm11, %v10
    %s13 = scalar_lea.vmem %s0, 14
    %s14 = smov 3
    %v15 = vld [vmem:[%s13] ss:$16 sm:%s14]
    %16 = vrot.lane.b32.xlu0 %v15, 112
    %v17 = vpop.permute.xlu0 %16
    %vm18 = vcmask 982912
    %19 = vst.msk [vmem:[#allocation0] ss:$8 sm:$0x3] %vm18, %v17
    %s20 = scalar_lea.vmem %s0, 13
    %s21 = smov 3
    %v22 = vld [vmem:[%s20] ss:$16 sm:%s21]
    %23 = vrot.lane.b32.xlu0 %v22, 104
    %v24 = vpop.permute.xlu0 %23
    %vm25 = vcmask 917312
    %26 = vst.msk [vmem:[#allocation0] ss:$8 sm:$0x3] %vm25, %v24
    %s27 = scalar_lea.vmem %s0, 12
    %s28 = smov 3
    %v29 = vld [vmem:[%s27] ss:$16 sm:%s28]
    %30 = vrot.lane.b32.xlu0 %v29, 96
    %v31 = vpop.permute.xlu0 %30
    %vm32 = vcmask 851712
    %33 = vst.msk [vmem:[#allocation0] ss:$8 sm:$0x3] %vm32, %v31
    %s34 = scalar_lea.vmem %s0, 11
    %s35 = smov 3
    %v36 = vld [vmem:[%s34] ss:$16 sm:%s35]
    %37 = vrot.lane.b32.xlu0 %v36, 88
    %v38 = vpop.permute.xlu0 %37
    %vm39 = vcmask 786112
    %40 = vst.msk [vmem:[#allocation0] ss:$8 sm:$0x3] %vm39, %v38
    %s41 = scalar_lea.vmem %s0, 10
    %s42 = smov 3
    %v43 = vld [vmem:[%s41] ss:$16 sm:%s42]
    %44 = vrot.lane.b32.xlu0 %v43, 80
    %v45 = vpop.permute.xlu0 %44
    %vm46 = vcmask 720512
    %47 = vst.msk [vmem:[#allocation0] ss:$8 sm:$0x3] %vm46, %v45
    %s48 = scalar_lea.vmem %s0, 9
    %s49 = smov 3
    %v50 = vld [vmem:[%s48] ss:$16 sm:%s49]
    %51 = vrot.lane.b32.xlu0 %v50, 72
    %v52 = vpop.permute.xlu0 %51
    %vm53 = vcmask 654912
    %54 = vst.msk [vmem:[#allocation0] ss:$8 sm:$0x3] %vm53, %v52
    %s55 = scalar_lea.vmem %s0, 8
    %s56 = smov 3
    %v57 = vld [vmem:[%s55] ss:$16 sm:%s56]
    %58 = vrot.lane.b32.xlu0 %v57, 64
    %v59 = vpop.permute.xlu0 %58
    %vm60 = vcmask 589312
    %61 = vst.msk [vmem:[#allocation0] ss:$8 sm:$0x3] %vm60, %v59
    %s62 = scalar_lea.vmem %s0, 7
    %s63 = smov 3
    %v64 = vld [vmem:[%s62] ss:$16 sm:%s63]
    %65 = vrot.lane.b32.xlu0 %v64, 56
    %v66 = vpop.permute.xlu0 %65
    %vm67 = vcmask 523712
    %68 = vst.msk [vmem:[#allocation0] ss:$8 sm:$0x3] %vm67, %v66
    %s69 = scalar_lea.vmem %s0, 6
    %s70 = smov 3
    %v71 = vld [vmem:[%s69] ss:$16 sm:%s70]
    %72 = vrot.lane.b32.xlu0 %v71, 48
    %v73 = vpop.permute.xlu0 %72
    %vm74 = vcmask 458112
    %75 = vst.msk [vmem:[#allocation0] ss:$8 sm:$0x3] %vm74, %v73
    %s76 = scalar_lea.vmem %s0, 5
    %s77 = smov 3
    %v78 = vld [vmem:[%s76] ss:$16 sm:%s77]
    %79 = vrot.lane.b32.xlu0 %v78, 40
    %v80 = vpop.permute.xlu0 %79
    %vm81 = vcmask 392512
    %82 = vst.msk [vmem:[#allocation0] ss:$8 sm:$0x3] %vm81, %v80
    %s83 = scalar_lea.vmem %s0, 4
    %s84 = smov 3
    %v85 = vld [vmem:[%s83] ss:$16 sm:%s84]
    %86 = vrot.lane.b32.xlu0 %v85, 32
    %v87 = vpop.permute.xlu0 %86
    %vm88 = vcmask 326912
    %89 = vst.msk [vmem:[#allocation0] ss:$8 sm:$0x3] %vm88, %v87
    %s90 = scalar_lea.vmem %s0, 3
    %s91 = smov 3
    %v92 = vld [vmem:[%s90] ss:$16 sm:%s91]
    %93 = vrot.lane.b32.xlu0 %v92, 24
    %v94 = vpop.permute.xlu0 %93
    %vm95 = vcmask 261312
    %96 = vst.msk [vmem:[#allocation0] ss:$8 sm:$0x3] %vm95, %v94
    %s97 = scalar_lea.vmem %s0, 2
    %s98 = smov 3
    %v99 = vld [vmem:[%s97] ss:$16 sm:%s98]
    %100 = vrot.lane.b32.xlu0 %v99, 16
    %v101 = vpop.permute.xlu0 %100
    %vm102 = vcmask 195712
    %103 = vst.msk [vmem:[#allocation0] ss:$8 sm:$0x3] %vm102, %v101
    %s104 = scalar_lea.vmem %s0, 1
    %s105 = smov 3
    %v106 = vld [vmem:[%s104] ss:$16 sm:%s105]
    %107 = vrot.lane.b32.xlu0 %v106, 8
    %v108 = vpop.permute.xlu0 %107
    %vm109 = vcmask 130112
    %110 = vst.msk [vmem:[#allocation0] ss:$8 sm:$0x3] %vm109, %v108
    %s112 = sshll.u32 1, 1
    %s113 = ssub.s32 %s112, 1
    %v115 = vld [vmem:[#allocation0] sm:%s113]
    %s116 = sshll.u32 1, 1
    %s117 = ssub.s32 %s116, 1
    %118 = vst [vmem:[%s1] sm:%s117] %v115
    %s119 = scalar_lea.vmem [#allocation0], 8
    %v120 = vld [vmem:[%s119] sm:%s113]
    %s121 = sshll.u32 1, 1
    %s122 = ssub.s32 %s121, 1
    %s123 = scalar_lea.vmem %s1, 1
    %124 = vst [vmem:[%s123] sm:%s122] %v120

// kernel: tile.13
$region0: #{tile.13}
  #allocation0 [shape = 's32[1]{0}', space=sflag, size = 0x4, scoped, tag = 'scoped memory for tile.13']
  %s0 = inlined_call_operand.vmem [shape: f32[4], index: 0, kind: input, shape index: {}]
  %s1 = inlined_call_operand.vmem [shape: f32[32,4], index: 1, kind: output, shape index: {}]
  // Predicated region
  $region2: #{tile.13} parent=0 // pred_check
    _
  $region3: #{tile.13} parent=0 // pred_check_branch
    %3 = sbr.rel (0) target = $region5
  $region4: #{tile.13} parent=0 // pred_region
    _
  $region5: #{tile.13} parent=0 // pred_fallthru
    _
  %v4 = vld [vmem:[%s0] ss:$0 sm:$0xff]
  %5 = vst [vmem:[%s1] sm:$0xff] %v4
  %s6 = scalar_lea.vmem %s1, 8
  %7 = vst [vmem:[%s6] sm:$0xff] %v4
  %s8 = scalar_lea.vmem %s1, 16
  %9 = vst [vmem:[%s8] sm:$0xff] %v4
  %s10 = scalar_lea.vmem %s1, 24
  %11 = vst [vmem:[%s10] sm:$0xff] %v4

// kernel: tile.14
$region0: #{tile.14}
  %s0 = inlined_call_operand.vmem [shape: f32[32,4], index: 0, kind: input, shape index: {}]
  %s1 = inlined_call_operand.vmem [shape: f32[1,128], index: 1, kind: output, shape index: {}]
  $region1: #{tile.14} parent=0
    #allocation0 [shape = 'u8[4096]{0}', space=vmem, size = 0x1000, scoped, tag = 'scoped mem for output reshape']
    %v2 = vld [vmem:[%s0] sm:$0x1]
    %vm3 = vcmask 31744
    %4 = vst.msk [vmem:[#allocation0] sm:$0x1] %vm3, %v2
    %s5 = scalar_lea.vmem %s0, 31
    %v6 = vld [vmem:[%s5] sm:$0x1]
    %7 = vrot.lane.b32.xlu0 %v6, 124
    %v8 = vpop.permute.xlu0 %7
    %vm9 = vcmask 1048544
    %10 = vst.msk [vmem:[#allocation0] sm:$0x1] %vm9, %v8
    %s11 = scalar_lea.vmem %s0, 30
    %v12 = vld [vmem:[%s11] sm:$0x1]
    %13 = vrot.lane.b32.xlu0 %v12, 120
    %v14 = vpop.permute.xlu0 %13
    %vm15 = vcmask 1015744
    %16 = vst.msk [vmem:[#allocation0] sm:$0x1] %vm15, %v14
    %s17 = scalar_lea.vmem %s0, 29
    %v18 = vld [vmem:[%s17] sm:$0x1]
    %19 = vrot.lane.b32.xlu0 %v18, 116
    %v20 = vpop.permute.xlu0 %19
    %vm21 = vcmask 982944
    %22 = vst.msk [vmem:[#allocation0] sm:$0x1] %vm21, %v20
    %s23 = scalar_lea.vmem %s0, 28
    %v24 = vld [vmem:[%s23] sm:$0x1]
    %25 = vrot.lane.b32.xlu0 %v24, 112
    %v26 = vpop.permute.xlu0 %25
    %vm27 = vcmask 950144
    %28 = vst.msk [vmem:[#allocation0] sm:$0x1] %vm27, %v26
    %s29 = scalar_lea.vmem %s0, 27
    %v30 = vld [vmem:[%s29] sm:$0x1]
    %31 = vrot.lane.b32.xlu0 %v30, 108
    %v32 = vpop.permute.xlu0 %31
    %vm33 = vcmask 917344
    %34 = vst.msk [vmem:[#allocation0] sm:$0x1] %vm33, %v32
    %s35 = scalar_lea.vmem %s0, 26
    %v36 = vld [vmem:[%s35] sm:$0x1]
    %37 = vrot.lane.b32.xlu0 %v36, 104
    %v38 = vpop.permute.xlu0 %37
    %vm39 = vcmask 884544
    %40 = vst.msk [vmem:[#allocation0] sm:$0x1] %vm39, %v38
    %s41 = scalar_lea.vmem %s0, 25
    %v42 = vld [vmem:[%s41] sm:$0x1]
    %43 = vrot.lane.b32.xlu0 %v42, 100
    %v44 = vpop.permute.xlu0 %43
    %vm45 = vcmask 851744
    %46 = vst.msk [vmem:[#allocation0] sm:$0x1] %vm45, %v44
    %s47 = scalar_lea.vmem %s0, 24
    %v48 = vld [vmem:[%s47] sm:$0x1]
    %49 = vrot.lane.b32.xlu0 %v48, 96
    %v50 = vpop.permute.xlu0 %49
    %vm51 = vcmask 818944
    %52 = vst.msk [vmem:[#allocation0] sm:$0x1] %vm51, %v50
    %s53 = scalar_lea.vmem %s0, 23
    %v54 = vld [vmem:[%s53] sm:$0x1]
    %55 = vrot.lane.b32.xlu0 %v54, 92
    %v56 = vpop.permute.xlu0 %55
    %vm57 = vcmask 786144
    %58 = vst.msk [vmem:[#allocation0] sm:$0x1] %vm57, %v56
    %s59 = scalar_lea.vmem %s0, 22
    %v60 = vld [vmem:[%s59] sm:$0x1]
    %61 = vrot.lane.b32.xlu0 %v60, 88
    %v62 = vpop.permute.xlu0 %61
    %vm63 = vcmask 753344
    %64 = vst.msk [vmem:[#allocation0] sm:$0x1] %vm63, %v62
    %s65 = scalar_lea.vmem %s0, 21
    %v66 = vld [vmem:[%s65] sm:$0x1]
    %67 = vrot.lane.b32.xlu0 %v66, 84
    %v68 = vpop.permute.xlu0 %67
    %vm69 = vcmask 720544
    %70 = vst.msk [vmem:[#allocation0] sm:$0x1] %vm69, %v68
    %s71 = scalar_lea.vmem %s0, 20
    %v72 = vld [vmem:[%s71] sm:$0x1]
    %73 = vrot.lane.b32.xlu0 %v72, 80
    %v74 = vpop.permute.xlu0 %73
    %vm75 = vcmask 687744
    %76 = vst.msk [vmem:[#allocation0] sm:$0x1] %vm75, %v74
    %s77 = scalar_lea.vmem %s0, 19
    %v78 = vld [vmem:[%s77] sm:$0x1]
    %79 = vrot.lane.b32.xlu0 %v78, 76
    %v80 = vpop.permute.xlu0 %79
    %vm81 = vcmask 654944
    %82 = vst.msk [vmem:[#allocation0] sm:$0x1] %vm81, %v80
    %s83 = scalar_lea.vmem %s0, 18
    %v84 = vld [vmem:[%s83] sm:$0x1]
    %85 = vrot.lane.b32.xlu0 %v84, 72
    %v86 = vpop.permute.xlu0 %85
    %vm87 = vcmask 622144
    %88 = vst.msk [vmem:[#allocation0] sm:$0x1] %vm87, %v86
    %s89 = scalar_lea.vmem %s0, 17
    %v90 = vld [vmem:[%s89] sm:$0x1]
    %91 = vrot.lane.b32.xlu0 %v90, 68
    %v92 = vpop.permute.xlu0 %91
    %vm93 = vcmask 589344
    %94 = vst.msk [vmem:[#allocation0] sm:$0x1] %vm93, %v92
    %s95 = scalar_lea.vmem %s0, 16
    %v96 = vld [vmem:[%s95] sm:$0x1]
    %97 = vrot.lane.b32.xlu0 %v96, 64
    %v98 = vpop.permute.xlu0 %97
    %vm99 = vcmask 556544
    %100 = vst.msk [vmem:[#allocation0] sm:$0x1] %vm99, %v98
    %s101 = scalar_lea.vmem %s0, 15
    %v102 = vld [vmem:[%s101] sm:$0x1]
    %103 = vrot.lane.b32.xlu0 %v102, 60
    %v104 = vpop.permute.xlu0 %103
    %vm105 = vcmask 523744
    %106 = vst.msk [vmem:[#allocation0] sm:$0x1] %vm105, %v104
    %s107 = scalar_lea.vmem %s0, 14
    %v108 = vld [vmem:[%s107] sm:$0x1]
    %109 = vrot.lane.b32.xlu0 %v108, 56
    %v110 = vpop.permute.xlu0 %109
    %vm111 = vcmask 490944
    %112 = vst.msk [vmem:[#allocation0] sm:$0x1] %vm111, %v110
    %s113 = scalar_lea.vmem %s0, 13
    %v114 = vld [vmem:[%s113] sm:$0x1]
    %115 = vrot.lane.b32.xlu0 %v114, 52
    %v116 = vpop.permute.xlu0 %115
    %vm117 = vcmask 458144
    %118 = vst.msk [vmem:[#allocation0] sm:$0x1] %vm117, %v116
    %s119 = scalar_lea.vmem %s0, 12
    %v120 = vld [vmem:[%s119] sm:$0x1]
    %121 = vrot.lane.b32.xlu0 %v120, 48
    %v122 = vpop.permute.xlu0 %121
    %vm123 = vcmask 425344
    %124 = vst.msk [vmem:[#allocation0] sm:$0x1] %vm123, %v122
    %s125 = scalar_lea.vmem %s0, 11
    %v126 = vld [vmem:[%s125] sm:$0x1]
    %127 = vrot.lane.b32.xlu0 %v126, 44
    %v128 = vpop.permute.xlu0 %127
    %vm129 = vcmask 392544
    %130 = vst.msk [vmem:[#allocation0] sm:$0x1] %vm129, %v128
    %s131 = scalar_lea.vmem %s0, 10
    %v132 = vld [vmem:[%s131] sm:$0x1]
    %133 = vrot.lane.b32.xlu0 %v132, 40
    %v134 = vpop.permute.xlu0 %133
    %vm135 = vcmask 359744
    %136 = vst.msk [vmem:[#allocation0] sm:$0x1] %vm135, %v134
    %s137 = scalar_lea.vmem %s0, 9
    %v138 = vld [vmem:[%s137] sm:$0x1]
    %139 = vrot.lane.b32.xlu0 %v138, 36
    %v140 = vpop.permute.xlu0 %139
    %vm141 = vcmask 326944
    %142 = vst.msk [vmem:[#allocation0] sm:$0x1] %vm141, %v140
    %s143 = scalar_lea.vmem %s0, 8
    %v144 = vld [vmem:[%s143] sm:$0x1]
    %145 = vrot.lane.b32.xlu0 %v144, 32
    %v146 = vpop.permute.xlu0 %145
    %vm147 = vcmask 294144
    %148 = vst.msk [vmem:[#allocation0] sm:$0x1] %vm147, %v146
    %s149 = scalar_lea.vmem %s0, 7
    %v150 = vld [vmem:[%s149] sm:$0x1]
    %151 = vrot.lane.b32.xlu0 %v150, 28
    %v152 = vpop.permute.xlu0 %151
    %vm153 = vcmask 261344
    %154 = vst.msk [vmem:[#allocation0] sm:$0x1] %vm153, %v152
    %s155 = scalar_lea.vmem %s0, 6
    %v156 = vld [vmem:[%s155] sm:$0x1]
    %157 = vrot.lane.b32.xlu0 %v156, 24
    %v158 = vpop.permute.xlu0 %157
    %vm159 = vcmask 228544
    %160 = vst.msk [vmem:[#allocation0] sm:$0x1] %vm159, %v158
    %s161 = scalar_lea.vmem %s0, 5
    %v162 = vld [vmem:[%s161] sm:$0x1]
    %163 = vrot.lane.b32.xlu0 %v162, 20
    %v164 = vpop.permute.xlu0 %163
    %vm165 = vcmask 195744
    %166 = vst.msk [vmem:[#allocation0] sm:$0x1] %vm165, %v164
    %s167 = scalar_lea.vmem %s0, 4
    %v168 = vld [vmem:[%s167] sm:$0x1]
    %169 = vrot.lane.b32.xlu0 %v168, 16
    %v170 = vpop.permute.xlu0 %169
    %vm171 = vcmask 162944
    %172 = vst.msk [vmem:[#allocation0] sm:$0x1] %vm171, %v170
    %s173 = scalar_lea.vmem %s0, 3
    %v174 = vld [vmem:[%s173] sm:$0x1]
    %175 = vrot.lane.b32.xlu0 %v174, 12
    %v176 = vpop.permute.xlu0 %175
    %vm177 = vcmask 130144
    %178 = vst.msk [vmem:[#allocation0] sm:$0x1] %vm177, %v176
    %s179 = scalar_lea.vmem %s0, 2
    %v180 = vld [vmem:[%s179] sm:$0x1]
    %181 = vrot.lane.b32.xlu0 %v180, 8
    %v182 = vpop.permute.xlu0 %181
    %vm183 = vcmask 97344
    %184 = vst.msk [vmem:[#allocation0] sm:$0x1] %vm183, %v182
    %s185 = scalar_lea.vmem %s0, 1
    %v186 = vld [vmem:[%s185] sm:$0x1]
    %187 = vrot.lane.b32.xlu0 %v186, 4
    %v188 = vpop.permute.xlu0 %187
    %vm189 = vcmask 64544
    %190 = vst.msk [vmem:[#allocation0] sm:$0x1] %vm189, %v188
    %s192 = sshll.u32 1, 1
    %s193 = ssub.s32 %s192, 1
    %v195 = vld [vmem:[#allocation0] sm:%s193]
    %s196 = sshll.u32 1, 1
    %s197 = ssub.s32 %s196, 1
    %198 = vst [vmem:[%s1] sm:%s197] %v195

</llo_original>
